<compile_context>
chip_gen: v7x
topology: tpu7x:2x2x1
jax: 0.10.0
libtpu: 0.0.40
codegen_flags: <defaults>
</compile_context>

<pallas_src>
import jax
import jax.numpy as jnp
from jax.experimental import pallas as pl
from jax.experimental.pallas import tpu as pltpu

_LANE = 128


def _conv1d_fused_kernel(
    x_ref,            # (1, C_in, TN)
    w1_ref, b1_ref,   # (C1, C_in), (C1, 1)   conv1 with BN folded in
    w2_ref, b2_ref,   # (C2, C1),  (C2, 1)    conv2 with BN folded in
    w3_ref,           # (C3, C2)              final conv
    wr_ref,           # (C3, C_in)            residual conv
    bf_ref,           # (C3, 1)               b3 + br (fused bias)
    o_ref,            # (1, C3, TN)
):
    x = x_ref[0]                                                  # (C_in, TN)

    # hidden layer 1: Conv1d(k=1) -> BN(eval, folded) -> ReLU
    h = jnp.dot(w1_ref[...], x, preferred_element_type=jnp.float32) + b1_ref[...]
    h = jnp.maximum(h, 0.0)

    # hidden layer 2: Conv1d(k=1) -> BN(eval, folded) -> ReLU
    h = jnp.dot(w2_ref[...], h, preferred_element_type=jnp.float32) + b2_ref[...]
    h = jnp.maximum(h, 0.0)

    # final Conv1d (no activation, last_func=None) + residual Conv1d branch
    y = (jnp.dot(w3_ref[...], h, preferred_element_type=jnp.float32)
         + jnp.dot(wr_ref[...], x, preferred_element_type=jnp.float32)
         + bf_ref[...])

    o_ref[0] = y.astype(o_ref.dtype)


def conv_1d_forward(x_ncl, params, *, n_tile=2048):
    """x_ncl: (B, C_in, N) float32 in PyTorch NCL layout.
    Returns (B, C_out, N) float32."""
    (w1, b1, s1, t1, w2, b2, s2, t2, w3, b3, wr, br) = params
    B, C_in, N = x_ncl.shape
    C_out = w3.shape[0]

    # Fold BatchNorm (eval mode) into the conv weights/biases.
    w1f = w1 * s1                 # s1 broadcasts (C1, 1) over C_in
    b1f = b1 * s1 + t1
    w2f = w2 * s2
    b2f = b2 * s2 + t2
    bf = b3 + br                  # fused final + residual bias

    # Lane-dense N tiling: TN is a multiple of 128; pad N up to a tile multiple.
    n_tile = max(_LANE, (n_tile // _LANE) * _LANE)
    TN = min(n_tile, pl.cdiv(N, _LANE) * _LANE)
    N_pad = pl.cdiv(N, TN) * TN
    if N_pad != N:
        x_ncl = jnp.pad(x_ncl, ((0, 0), (0, 0), (0, N_pad - N)))

    def full(a):
        return pl.BlockSpec(a.shape, lambda b, n: (0, 0))

    out = pl.pallas_call(
        _conv1d_fused_kernel,
        out_shape=jax.ShapeDtypeStruct((B, C_out, N_pad), jnp.float32),
        grid_spec=pltpu.PrefetchScalarGridSpec(
            num_scalar_prefetch=0,
            grid=(B, N_pad // TN),
            in_specs=[
                pl.BlockSpec((1, C_in, TN), lambda b, n: (b, 0, n)),  # x tile
                full(w1f), full(b1f),
                full(w2f), full(b2f),
                full(w3), full(wr), full(bf),
            ],
            out_specs=pl.BlockSpec((1, C_out, TN), lambda b, n: (b, 0, n)),
        ),
        compiler_params=pltpu.CompilerParams(
            dimension_semantics=("parallel", "parallel")),
    )(x_ncl, w1f, b1f, w2f, b2f, w3, wr, bf)

    return out[:, :, :N]


def _make_params(key, features):
    """Deterministic synthetic parameters mirroring the PyTorch module shapes.
    Conv1d(k=1) weight is stored (C_out, C_in); bias / BN stats are (C_out, 1).
    BatchNorm (eval mode) is represented as per-channel scale/shift."""
    keys = jax.random.split(key, 16)
    k = iter(keys)

    def conv(cin, cout):
        w = jax.random.normal(next(k), (cout, cin), jnp.float32) * 0.2
        b = jax.random.normal(next(k), (cout, 1), jnp.float32) * 0.05
        return w, b

    def bn(cout):
        gamma = 1.0 + 0.1 * jax.random.normal(next(k), (cout, 1), jnp.float32)
        beta = 0.05 * jax.random.normal(next(k), (cout, 1), jnp.float32)
        running_mean = 0.1 * jax.random.normal(next(k), (cout, 1), jnp.float32)
        running_var = 1.0 + 0.1 * jnp.abs(
            jax.random.normal(next(k), (cout, 1), jnp.float32))
        scale = gamma * jax.lax.rsqrt(running_var + 1e-5)
        shift = beta - running_mean * scale
        return scale, shift

    w1, b1 = conv(features[0], features[1])
    s1, t1 = bn(features[1])
    w2, b2 = conv(features[1], features[2])
    s2, t2 = bn(features[2])
    w3, b3 = conv(features[2], features[3])
    wr, br = conv(features[0], features[3])   # with_res=True branch
    return (w1, b1, s1, t1, w2, b2, s2, t2, w3, b3, wr, br)


def _reference(x_ncl, params):
    """Pure-JAX reference of the same forward pass (un-folded BN) in NCL."""
    (w1, b1, s1, t1, w2, b2, s2, t2, w3, b3, wr, br) = params

    def conv(w, b, x):  # w (Co, Ci), b (Co, 1), x (B, Ci, N) -> (B, Co, N)
        return jnp.einsum('oc,bcn->bon', w, x) + b[None]

    h = conv(w1, b1, x_ncl)
    h = h * s1[None] + t1[None]
    h = jnp.maximum(h, 0.0)
    h = conv(w2, b2, h)
    h = h * s2[None] + t2[None]
    h = jnp.maximum(h, 0.0)
    y = conv(w3, b3, h)
    r = conv(wr, br, x_ncl)
    return y + r


if __name__ == "__main__":
    features = [4, 32, 16, 8]
    B, N = 2, 16

    key = jax.random.PRNGKey(0)
    kx, kp = jax.random.split(key)
    x = jax.random.normal(kx, (B, features[0], N), jnp.float32)   # NCL layout
    params = _make_params(kp, features)

    out = conv_1d_forward(x, params)
    out = jax.block_until_ready(out)

    ref = _reference(x, params)
    assert out.shape == (B, features[-1], N)
    assert jnp.allclose(out, ref, atol=1e-4, rtol=1e-4)

    print("KERNEL_OK")
</pallas_src>

<mosaic_0001>
module attributes {stable_mosaic.version = 11 : i64} {
  func.func @_conv1d_fused_kernel(%arg0: i32, %arg1: i32, %arg2: memref<1x4x128xf32, #tpu.memory_space<vmem>>, %arg3: memref<32x4xf32, #tpu.memory_space<vmem>>, %arg4: memref<32x1xf32, #tpu.memory_space<vmem>>, %arg5: memref<16x32xf32, #tpu.memory_space<vmem>>, %arg6: memref<16x1xf32, #tpu.memory_space<vmem>>, %arg7: memref<8x16xf32, #tpu.memory_space<vmem>>, %arg8: memref<8x4xf32, #tpu.memory_space<vmem>>, %arg9: memref<8x1xf32, #tpu.memory_space<vmem>>, %arg10: memref<1x8x128xf32, #tpu.memory_space<vmem>>) attributes {dimension_semantics = [#tpu.dimension_semantics<parallel>, #tpu.dimension_semantics<parallel>], iteration_bounds = array<i64: 2, 1>, scalar_prefetch = 0 : i64, scratch_operands = 0 : i64, tpu.core_type = #tpu.core_type<tc>, window_params = [{transform_indices = @transform_0, window_bounds = array<i64: 1, 4, 128>}, {pipeline_mode = #tpu.pipeline_mode<synchronous>, transform_indices = @transform_1, window_bounds = array<i64: 32, 4>}, {pipeline_mode = #tpu.pipeline_mode<synchronous>, transform_indices = @transform_2, window_bounds = array<i64: 32, 1>}, {pipeline_mode = #tpu.pipeline_mode<synchronous>, transform_indices = @transform_3, window_bounds = array<i64: 16, 32>}, {pipeline_mode = #tpu.pipeline_mode<synchronous>, transform_indices = @transform_4, window_bounds = array<i64: 16, 1>}, {pipeline_mode = #tpu.pipeline_mode<synchronous>, transform_indices = @transform_5, window_bounds = array<i64: 8, 16>}, {pipeline_mode = #tpu.pipeline_mode<synchronous>, transform_indices = @transform_6, window_bounds = array<i64: 8, 4>}, {pipeline_mode = #tpu.pipeline_mode<synchronous>, transform_indices = @transform_7, window_bounds = array<i64: 8, 1>}, {transform_indices = @transform_8, window_bounds = array<i64: 1, 8, 128>}]} {
    %c0 = arith.constant 0 : index
    %c0_0 = arith.constant 0 : index
    %c0_1 = arith.constant 0 : index
    %0 = vector.load %arg2[%c0, %c0_0, %c0_1] : memref<1x4x128xf32, #tpu.memory_space<vmem>>, vector<1x4x128xf32>
    %1 = vector.shape_cast %0 : vector<1x4x128xf32> to vector<4x128xf32>
    %c0_2 = arith.constant 0 : index
    %c0_3 = arith.constant 0 : index
    %2 = vector.load %arg3[%c0_2, %c0_3] : memref<32x4xf32, #tpu.memory_space<vmem>>, vector<32x4xf32>
    %cst = arith.constant dense<0.000000e+00> : vector<32x128xf32>
    %3 = tpu.matmul %2, %1, %cst {dimension_numbers = #tpu.dot_dimension_numbers<[1], [0], [0], [1], [0, 0, 1, 1], [], []>} : vector<32x4xf32>, vector<4x128xf32>, vector<32x128xf32> -> vector<32x128xf32>
    %c0_4 = arith.constant 0 : index
    %c0_5 = arith.constant 0 : index
    %4 = vector.load %arg4[%c0_4, %c0_5] : memref<32x1xf32, #tpu.memory_space<vmem>>, vector<32x1xf32>
    %5 = vector.broadcast %4 : vector<32x1xf32> to vector<32x128xf32>
    %6 = arith.addf %3, %5 : vector<32x128xf32>
    %cst_6 = arith.constant 0.000000e+00 : f32
    %7 = vector.broadcast %cst_6 : f32 to vector<32x128xf32>
    %8 = arith.maximumf %6, %7 : vector<32x128xf32>
    %c0_7 = arith.constant 0 : index
    %c0_8 = arith.constant 0 : index
    %9 = vector.load %arg5[%c0_7, %c0_8] : memref<16x32xf32, #tpu.memory_space<vmem>>, vector<16x32xf32>
    %cst_9 = arith.constant dense<0.000000e+00> : vector<16x128xf32>
    %10 = tpu.matmul %9, %8, %cst_9 {dimension_numbers = #tpu.dot_dimension_numbers<[1], [0], [0], [1], [0, 0, 1, 1], [], []>} : vector<16x32xf32>, vector<32x128xf32>, vector<16x128xf32> -> vector<16x128xf32>
    %c0_10 = arith.constant 0 : index
    %c0_11 = arith.constant 0 : index
    %11 = vector.load %arg6[%c0_10, %c0_11] : memref<16x1xf32, #tpu.memory_space<vmem>>, vector<16x1xf32>
    %12 = vector.broadcast %11 : vector<16x1xf32> to vector<16x128xf32>
    %13 = arith.addf %10, %12 : vector<16x128xf32>
    %cst_12 = arith.constant 0.000000e+00 : f32
    %14 = vector.broadcast %cst_12 : f32 to vector<16x128xf32>
    %15 = arith.maximumf %13, %14 : vector<16x128xf32>
    %c0_13 = arith.constant 0 : index
    %c0_14 = arith.constant 0 : index
    %16 = vector.load %arg7[%c0_13, %c0_14] : memref<8x16xf32, #tpu.memory_space<vmem>>, vector<8x16xf32>
    %cst_15 = arith.constant dense<0.000000e+00> : vector<8x128xf32>
    %17 = tpu.matmul %16, %15, %cst_15 {dimension_numbers = #tpu.dot_dimension_numbers<[1], [0], [0], [1], [0, 0, 1, 1], [], []>} : vector<8x16xf32>, vector<16x128xf32>, vector<8x128xf32> -> vector<8x128xf32>
    %c0_16 = arith.constant 0 : index
    %c0_17 = arith.constant 0 : index
    %18 = vector.load %arg8[%c0_16, %c0_17] : memref<8x4xf32, #tpu.memory_space<vmem>>, vector<8x4xf32>
    %cst_18 = arith.constant dense<0.000000e+00> : vector<8x128xf32>
    %19 = tpu.matmul %18, %1, %cst_18 {dimension_numbers = #tpu.dot_dimension_numbers<[1], [0], [0], [1], [0, 0, 1, 1], [], []>} : vector<8x4xf32>, vector<4x128xf32>, vector<8x128xf32> -> vector<8x128xf32>
    %20 = arith.addf %17, %19 : vector<8x128xf32>
    %c0_19 = arith.constant 0 : index
    %c0_20 = arith.constant 0 : index
    %21 = vector.load %arg9[%c0_19, %c0_20] : memref<8x1xf32, #tpu.memory_space<vmem>>, vector<8x1xf32>
    %22 = vector.broadcast %21 : vector<8x1xf32> to vector<8x128xf32>
    %23 = arith.addf %20, %22 : vector<8x128xf32>
    %c0_21 = arith.constant 0 : index
    %c0_22 = arith.constant 0 : index
    %c0_23 = arith.constant 0 : index
    %24 = vector.load %arg10[%c0_21, %c0_22, %c0_23] : memref<1x8x128xf32, #tpu.memory_space<vmem>>, vector<1x8x128xf32>
    %25 = vector.shape_cast %24 : vector<1x8x128xf32> to vector<8x128xf32>
    %26 = vector.shape_cast %23 : vector<8x128xf32> to vector<1x8x128xf32>
    tpu.vector_store %arg10[%c0_21, %c0_22, %c0_23], %26 {strides = array<i32>} : memref<1x8x128xf32, #tpu.memory_space<vmem>>, vector<1x8x128xf32>,
    return
  }
  func.func @transform_0(%arg0: i32, %arg1: i32) -> (i32, i32, i32) {
    %c0_i32 = arith.constant 0 : i32
    %c0_i32_0 = arith.constant 0 : i32
    return %arg0, %c0_i32, %arg1 : i32, i32, i32
  }
  func.func @transform_1(%arg0: i32, %arg1: i32) -> (i32, i32) {
    %c0_i32 = arith.constant 0 : i32
    %c0_i32_0 = arith.constant 0 : i32
    %c0_i32_1 = arith.constant 0 : i32
    return %c0_i32, %c0_i32_0 : i32, i32
  }
  func.func @transform_2(%arg0: i32, %arg1: i32) -> (i32, i32) {
    %c0_i32 = arith.constant 0 : i32
    %c0_i32_0 = arith.constant 0 : i32
    %c0_i32_1 = arith.constant 0 : i32
    return %c0_i32, %c0_i32_0 : i32, i32
  }
  func.func @transform_3(%arg0: i32, %arg1: i32) -> (i32, i32) {
    %c0_i32 = arith.constant 0 : i32
    %c0_i32_0 = arith.constant 0 : i32
    %c0_i32_1 = arith.constant 0 : i32
    return %c0_i32, %c0_i32_0 : i32, i32
  }
  func.func @transform_4(%arg0: i32, %arg1: i32) -> (i32, i32) {
    %c0_i32 = arith.constant 0 : i32
    %c0_i32_0 = arith.constant 0 : i32
    %c0_i32_1 = arith.constant 0 : i32
    return %c0_i32, %c0_i32_0 : i32, i32
  }
  func.func @transform_5(%arg0: i32, %arg1: i32) -> (i32, i32) {
    %c0_i32 = arith.constant 0 : i32
    %c0_i32_0 = arith.constant 0 : i32
    %c0_i32_1 = arith.constant 0 : i32
    return %c0_i32, %c0_i32_0 : i32, i32
  }
  func.func @transform_6(%arg0: i32, %arg1: i32) -> (i32, i32) {
    %c0_i32 = arith.constant 0 : i32
    %c0_i32_0 = arith.constant 0 : i32
    %c0_i32_1 = arith.constant 0 : i32
    return %c0_i32, %c0_i32_0 : i32, i32
  }
  func.func @transform_7(%arg0: i32, %arg1: i32) -> (i32, i32) {
    %c0_i32 = arith.constant 0 : i32
    %c0_i32_0 = arith.constant 0 : i32
    %c0_i32_1 = arith.constant 0 : i32
    return %c0_i32, %c0_i32_0 : i32, i32
  }
  func.func @transform_8(%arg0: i32, %arg1: i32) -> (i32, i32, i32) {
    %c0_i32 = arith.constant 0 : i32
    %c0_i32_0 = arith.constant 0 : i32
    return %arg0, %c0_i32, %arg1 : i32, i32, i32
  }
}

</mosaic_0001>

<llo_original>
// kernel: tpu_custom_call.1
$region0: #{tpu_custom_call.1}
  #allocation0 [shape = 'u32[]', space=smem, size = 0x4, offset = 0x4, fixed_abs, tag = 'smem constant byte address 0x4 - core index']
  #allocation1 [shape = 'u32[144,128]{1,0:T(1,128)}', space=vmem, size = 0x12000, scoped, tag = 'internal scratch']
  %s0 = inlined_call_operand.vmem [shape: f32[2,4,128], index: 0, kind: input, shape index: {}]
  %s1 = inlined_call_operand.vmem [shape: f32[32,4], index: 1, kind: input, shape index: {}]
  %s2 = inlined_call_operand.vmem [shape: f32[32,1], index: 2, kind: input, shape index: {}]
  %s3 = inlined_call_operand.vmem [shape: f32[16,32], index: 3, kind: input, shape index: {}]
  %s4 = inlined_call_operand.vmem [shape: f32[16,1], index: 4, kind: input, shape index: {}]
  %s5 = inlined_call_operand.vmem [shape: f32[8,16], index: 5, kind: input, shape index: {}]
  %s6 = inlined_call_operand.vmem [shape: f32[8,4], index: 6, kind: input, shape index: {}]
  %s7 = inlined_call_operand.vmem [shape: f32[8,1], index: 7, kind: input, shape index: {}]
  %s8 = inlined_call_operand.hbm [shape: f32[2,8,128], index: 8, kind: output, shape index: {}]
  %s9 = sld [smem:[#allocation0]]
  $region65: #{tpu_custom_call.1} parent=0
    _
  %s11 = ssub.s32 1, %s9
  %s12 = scalar_select 0, %s11, %s9
  $region1: #{tpu_custom_call.1} parent=0
    #allocation2 [shape = 'u8[8192]{0}', space=vmem, size = 0x2000, scoped, tag = 'output window, operand 0']
    #allocation3 [shape = 's32[2]{0}', space=sflag, size = 0x8, scoped, tag = 'scoped memory for tpu_custom_call.1']
    %13 = vsyncpa [#allocation3], 0
    %s14 = scalar_lea.sflag [#allocation3], 1
    %15 = vsyncpa %s14, 0
    loop: start=0, step=1, limit=4
    $region2: #{tpu_custom_call.1} parent=1 // loop_pre_header
      _
    $region3: #{tpu_custom_call.1} parent=1 // loop_header
      %s17 = sphi 0, %s21
      %p18 = scmp.ge.s32.totalorder %s17, 4
      %s24 = sphi 0, %s36
      %s25 = sphi 0, %s32
      %s26 = sphi 0, %s24
      %s27 = sphi 0, %s25
      %s28 = sphi 0, %s26
      %s29 = sphi 0, %s27
      %s41 = sphi 0, %s43
      %s44 = sphi 0, %s41
      %s45 = sphi 0, %s44
      %s61 = sphi 0, %s45
      %s65 = sphi 0, %s65
      %s67 = sphi 0, %s65
      %s68 = sphi 0, %s67
      %s82 = sphi 0, %s68
      %s86 = sphi 0, %s86
      %s88 = sphi 0, %s86
      %s89 = sphi 0, %s88
      %s103 = sphi 0, %s89
      %s107 = sphi 0, %s107
      %s109 = sphi 0, %s107
      %s110 = sphi 0, %s109
      %s124 = sphi 0, %s110
      %s128 = sphi 0, %s128
      %s130 = sphi 0, %s128
      %s131 = sphi 0, %s130
      %s145 = sphi 0, %s131
      %s149 = sphi 0, %s149
      %s151 = sphi 0, %s149
      %s152 = sphi 0, %s151
      %s166 = sphi 0, %s152
      %s170 = sphi 0, %s170
      %s172 = sphi 0, %s170
      %s173 = sphi 0, %s172
      %s187 = sphi 0, %s173
      %s191 = sphi 0, %s191
      %s193 = sphi 0, %s191
      %s194 = sphi 0, %s193
      %s208 = sphi 0, %s194
      %s216 = sphi 0, %s218
      %s219 = sphi 0, %s216
      %s220 = sphi 0, %s219
      %s236 = sphi 0, %s220
    $region4: #{tpu_custom_call.1} parent=1 // loop_header_branch
      %20 = sbr.rel (%p18) target = $region8
    $region5: #{tpu_custom_call.1} parent=1 // loop_body
      %s22 = ssub.s32 %s17, 1
      %s23 = ssub.s32 %s17, 2
      %s30 = sadd.s32 1, %s25
      %p31 = scmp.ge.s32.totalorder %s30, 1
      %s32 = scalar_select %p31, 0, %s30
      %s33 = sadd.s32 1, %s24
      %s34 = scalar_select %p31, %s33, %s24
      %p35 = scmp.ge.s32.totalorder %s34, 2
      %s36 = scalar_select %p35, 0, %s34
      %s37 = ssub.s32 %s24, %s36
      %s38 = ssub.s32 %s25, %s32
      %s39 = sor.u32 %s37, %s38
      %p40 = scmp.eq.s32.totalorder %s39, 0
      %s42 = sadd.s32 %s41, 1
      %s43 = scalar_select %p40, %s41, %s42
      %p46 = pneg %p40
      %p47 = scmp.eq.s32.totalorder %s17, 1
      %p48 = por %p46, %p47
      %p49 = scmp.ne.s32.totalorder %s41, %s44
      %p50 = scmp.eq.s32.totalorder %s17, 0
      %p51 = por %p49, %p50
      %p52 = scmp.ne.s32.totalorder %s41, %s44
      %p53 = scmp.eq.s32.totalorder %s22, 1
      %p54 = por %p52, %p53
      %p55 = scmp.ne.s32.totalorder %s44, %s45
      %p56 = scmp.eq.s32.totalorder %s22, 0
      %p57 = por %p55, %p56
      %p58 = scmp.ne.s32.totalorder %s44, %s45
      %p59 = scmp.eq.s32.totalorder %s23, 1
      %p60 = por %p58, %p59
      %p62 = scmp.ne.s32.totalorder %s45, %s61
      %p63 = scmp.eq.s32.totalorder %s23, 0
      %p64 = por %p62, %p63
      %s66 = sadd.s32 %s65, 1
      %p69 = scmp.eq.s32.totalorder %s17, 1
      %p70 = scmp.ne.s32.totalorder %s65, %s67
      %p71 = scmp.eq.s32.totalorder %s17, 0
      %p72 = por %p70, %p71
      %p73 = scmp.ne.s32.totalorder %s65, %s67
      %p74 = scmp.eq.s32.totalorder %s22, 1
      %p75 = por %p73, %p74
      %p76 = scmp.ne.s32.totalorder %s67, %s68
      %p77 = scmp.eq.s32.totalorder %s22, 0
      %p78 = por %p76, %p77
      %p79 = scmp.ne.s32.totalorder %s67, %s68
      %p80 = scmp.eq.s32.totalorder %s23, 1
      %p81 = por %p79, %p80
      %p83 = scmp.ne.s32.totalorder %s68, %s82
      %p84 = scmp.eq.s32.totalorder %s23, 0
      %p85 = por %p83, %p84
      %s87 = sadd.s32 %s86, 1
      %p90 = scmp.eq.s32.totalorder %s17, 1
      %p91 = scmp.ne.s32.totalorder %s86, %s88
      %p92 = scmp.eq.s32.totalorder %s17, 0
      %p93 = por %p91, %p92
      %p94 = scmp.ne.s32.totalorder %s86, %s88
      %p95 = scmp.eq.s32.totalorder %s22, 1
      %p96 = por %p94, %p95
      %p97 = scmp.ne.s32.totalorder %s88, %s89
      %p98 = scmp.eq.s32.totalorder %s22, 0
      %p99 = por %p97, %p98
      %p100 = scmp.ne.s32.totalorder %s88, %s89
      %p101 = scmp.eq.s32.totalorder %s23, 1
      %p102 = por %p100, %p101
      %p104 = scmp.ne.s32.totalorder %s89, %s103
      %p105 = scmp.eq.s32.totalorder %s23, 0
      %p106 = por %p104, %p105
      %s108 = sadd.s32 %s107, 1
      %p111 = scmp.eq.s32.totalorder %s17, 1
      %p112 = scmp.ne.s32.totalorder %s107, %s109
      %p113 = scmp.eq.s32.totalorder %s17, 0
      %p114 = por %p112, %p113
      %p115 = scmp.ne.s32.totalorder %s107, %s109
      %p116 = scmp.eq.s32.totalorder %s22, 1
      %p117 = por %p115, %p116
      %p118 = scmp.ne.s32.totalorder %s109, %s110
      %p119 = scmp.eq.s32.totalorder %s22, 0
      %p120 = por %p118, %p119
      %p121 = scmp.ne.s32.totalorder %s109, %s110
      %p122 = scmp.eq.s32.totalorder %s23, 1
      %p123 = por %p121, %p122
      %p125 = scmp.ne.s32.totalorder %s110, %s124
      %p126 = scmp.eq.s32.totalorder %s23, 0
      %p127 = por %p125, %p126
      %s129 = sadd.s32 %s128, 1
      %p132 = scmp.eq.s32.totalorder %s17, 1
      %p133 = scmp.ne.s32.totalorder %s128, %s130
      %p134 = scmp.eq.s32.totalorder %s17, 0
      %p135 = por %p133, %p134
      %p136 = scmp.ne.s32.totalorder %s128, %s130
      %p137 = scmp.eq.s32.totalorder %s22, 1
      %p138 = por %p136, %p137
      %p139 = scmp.ne.s32.totalorder %s130, %s131
      %p140 = scmp.eq.s32.totalorder %s22, 0
      %p141 = por %p139, %p140
      %p142 = scmp.ne.s32.totalorder %s130, %s131
      %p143 = scmp.eq.s32.totalorder %s23, 1
      %p144 = por %p142, %p143
      %p146 = scmp.ne.s32.totalorder %s131, %s145
      %p147 = scmp.eq.s32.totalorder %s23, 0
      %p148 = por %p146, %p147
      %s150 = sadd.s32 %s149, 1
      %p153 = scmp.eq.s32.totalorder %s17, 1
      %p154 = scmp.ne.s32.totalorder %s149, %s151
      %p155 = scmp.eq.s32.totalorder %s17, 0
      %p156 = por %p154, %p155
      %p157 = scmp.ne.s32.totalorder %s149, %s151
      %p158 = scmp.eq.s32.totalorder %s22, 1
      %p159 = por %p157, %p158
      %p160 = scmp.ne.s32.totalorder %s151, %s152
      %p161 = scmp.eq.s32.totalorder %s22, 0
      %p162 = por %p160, %p161
      %p163 = scmp.ne.s32.totalorder %s151, %s152
      %p164 = scmp.eq.s32.totalorder %s23, 1
      %p165 = por %p163, %p164
      %p167 = scmp.ne.s32.totalorder %s152, %s166
      %p168 = scmp.eq.s32.totalorder %s23, 0
      %p169 = por %p167, %p168
      %s171 = sadd.s32 %s170, 1
      %p174 = scmp.eq.s32.totalorder %s17, 1
      %p175 = scmp.ne.s32.totalorder %s170, %s172
      %p176 = scmp.eq.s32.totalorder %s17, 0
      %p177 = por %p175, %p176
      %p178 = scmp.ne.s32.totalorder %s170, %s172
      %p179 = scmp.eq.s32.totalorder %s22, 1
      %p180 = por %p178, %p179
      %p181 = scmp.ne.s32.totalorder %s172, %s173
      %p182 = scmp.eq.s32.totalorder %s22, 0
      %p183 = por %p181, %p182
      %p184 = scmp.ne.s32.totalorder %s172, %s173
      %p185 = scmp.eq.s32.totalorder %s23, 1
      %p186 = por %p184, %p185
      %p188 = scmp.ne.s32.totalorder %s173, %s187
      %p189 = scmp.eq.s32.totalorder %s23, 0
      %p190 = por %p188, %p189
      %s192 = sadd.s32 %s191, 1
      %p195 = scmp.eq.s32.totalorder %s17, 1
      %p196 = scmp.ne.s32.totalorder %s191, %s193
      %p197 = scmp.eq.s32.totalorder %s17, 0
      %p198 = por %p196, %p197
      %p199 = scmp.ne.s32.totalorder %s191, %s193
      %p200 = scmp.eq.s32.totalorder %s22, 1
      %p201 = por %p199, %p200
      %p202 = scmp.ne.s32.totalorder %s193, %s194
      %p203 = scmp.eq.s32.totalorder %s22, 0
      %p204 = por %p202, %p203
      %p205 = scmp.ne.s32.totalorder %s193, %s194
      %p206 = scmp.eq.s32.totalorder %s23, 1
      %p207 = por %p205, %p206
      %p209 = scmp.ne.s32.totalorder %s194, %s208
      %p210 = scmp.eq.s32.totalorder %s23, 0
      %p211 = por %p209, %p210
      %s212 = ssub.s32 %s24, %s36
      %s213 = ssub.s32 %s25, %s32
      %s214 = sor.u32 %s212, %s213
      %p215 = scmp.eq.s32.totalorder %s214, 0
      %s217 = sadd.s32 %s216, 1
      %s218 = scalar_select %p215, %s216, %s217
      %p221 = pneg %p215
      %p222 = scmp.eq.s32.totalorder %s17, 1
      %p223 = por %p221, %p222
      %p224 = scmp.ne.s32.totalorder %s216, %s219
      %p225 = scmp.eq.s32.totalorder %s17, 0
      %p226 = por %p224, %p225
      %p227 = scmp.ne.s32.totalorder %s216, %s219
      %p228 = scmp.eq.s32.totalorder %s22, 1
      %p229 = por %p227, %p228
      %p230 = scmp.ne.s32.totalorder %s219, %s220
      %p231 = scmp.eq.s32.totalorder %s22, 0
      %p232 = por %p230, %p231
      %p233 = scmp.ne.s32.totalorder %s219, %s220
      %p234 = scmp.eq.s32.totalorder %s23, 1
      %p235 = por %p233, %p234
      %p237 = scmp.ne.s32.totalorder %s220, %s236
      %p238 = scmp.eq.s32.totalorder %s23, 0
      %p239 = por %p237, %p238
      %p240 = scmp.le.s32.totalorder 1, %s17
      %p241 = scmp.lt.s32.totalorder %s17, 3
      %p242 = pnand %p240, %p241
      %p243 = pneg %p242
      // Predicated region
      $region9: #{tpu_custom_call.1} parent=5 // pred_check
        _
      $region10: #{tpu_custom_call.1} parent=5 // pred_check_branch
        %245 = sbr.rel (%p242) target = $region12
      $region11: #{tpu_custom_call.1} parent=5 // pred_region
        %s246 = ssub.s32 %s17, 1
        // Predicated region
        $region13: #{tpu_custom_call.1} parent=11 // pred_check
          %p247 = pneg %p78
        $region14: #{tpu_custom_call.1} parent=11 // pred_check_branch
          %249 = sbr.rel (%p247) target = $region16
        $region15: #{tpu_custom_call.1} parent=11 // pred_region
          _
        $region16: #{tpu_custom_call.1} parent=11 // pred_fallthru
          _
        // Predicated region
        $region17: #{tpu_custom_call.1} parent=11 // pred_check
          %p250 = pneg %p99
        $region18: #{tpu_custom_call.1} parent=11 // pred_check_branch
          %252 = sbr.rel (%p250) target = $region20
        $region19: #{tpu_custom_call.1} parent=11 // pred_region
          _
        $region20: #{tpu_custom_call.1} parent=11 // pred_fallthru
          _
        // Predicated region
        $region21: #{tpu_custom_call.1} parent=11 // pred_check
          %p253 = pneg %p120
        $region22: #{tpu_custom_call.1} parent=11 // pred_check_branch
          %255 = sbr.rel (%p253) target = $region24
        $region23: #{tpu_custom_call.1} parent=11 // pred_region
          _
        $region24: #{tpu_custom_call.1} parent=11 // pred_fallthru
          _
        // Predicated region
        $region25: #{tpu_custom_call.1} parent=11 // pred_check
          %p256 = pneg %p141
        $region26: #{tpu_custom_call.1} parent=11 // pred_check_branch
          %258 = sbr.rel (%p256) target = $region28
        $region27: #{tpu_custom_call.1} parent=11 // pred_region
          _
        $region28: #{tpu_custom_call.1} parent=11 // pred_fallthru
          _
        // Predicated region
        $region29: #{tpu_custom_call.1} parent=11 // pred_check
          %p259 = pneg %p162
        $region30: #{tpu_custom_call.1} parent=11 // pred_check_branch
          %261 = sbr.rel (%p259) target = $region32
        $region31: #{tpu_custom_call.1} parent=11 // pred_region
          _
        $region32: #{tpu_custom_call.1} parent=11 // pred_fallthru
          _
        // Predicated region
        $region33: #{tpu_custom_call.1} parent=11 // pred_check
          %p262 = pneg %p183
        $region34: #{tpu_custom_call.1} parent=11 // pred_check_branch
          %264 = sbr.rel (%p262) target = $region36
        $region35: #{tpu_custom_call.1} parent=11 // pred_region
          _
        $region36: #{tpu_custom_call.1} parent=11 // pred_fallthru
          _
        // Predicated region
        $region37: #{tpu_custom_call.1} parent=11 // pred_check
          %p265 = pneg %p204
        $region38: #{tpu_custom_call.1} parent=11 // pred_check_branch
          %267 = sbr.rel (%p265) target = $region40
        $region39: #{tpu_custom_call.1} parent=11 // pred_region
          _
        $region40: #{tpu_custom_call.1} parent=11 // pred_fallthru
          _
      $region12: #{tpu_custom_call.1} parent=5 // pred_fallthru
        _
      %p268 = scmp.lt.s32.totalorder %s17, 2
      // Predicated region
      $region41: #{tpu_custom_call.1} parent=5 // pred_check
        %p269 = pneg %p268
      $region42: #{tpu_custom_call.1} parent=5 // pred_check_branch
        %271 = sbr.rel (%p269) target = $region44
      $region43: #{tpu_custom_call.1} parent=5 // pred_region
        // Predicated region
        $region45: #{tpu_custom_call.1} parent=43 // pred_check
          %p272 = pneg %p51
        $region46: #{tpu_custom_call.1} parent=43 // pred_check_branch
          %274 = sbr.rel (%p272) target = $region48
        $region47: #{tpu_custom_call.1} parent=43 // pred_region
          %p275 = scmp.lt.s32.totalorder %s24, 1
          %s276 = scalar_select %p275, %s24, 1
          %p277 = scmp.lt.s32.totalorder %s25, 0
          %s278 = scalar_select %p277, %s25, 0
          %s279 = sadd.s32 %s278, %s276
          %s280 = smul.addr %s279, 4
          %s281 = scalar_lea.vmem %s0, %s280
        $region48: #{tpu_custom_call.1} parent=43 // pred_fallthru
          _
      $region44: #{tpu_custom_call.1} parent=5 // pred_fallthru
        _
      %p282 = scmp.le.s32.totalorder 1, %s17
      %p283 = scmp.lt.s32.totalorder %s17, 3
      %p284 = pnand %p282, %p283
      %p285 = pneg %p284
      // Predicated region
      $region49: #{tpu_custom_call.1} parent=5 // pred_check
        _
      $region50: #{tpu_custom_call.1} parent=5 // pred_check_branch
        %287 = sbr.rel (%p284) target = $region52
      $region51: #{tpu_custom_call.1} parent=5 // pred_region
        %s288 = ssub.s32 %s17, 1
        %p289 = scmp.lt.s32.totalorder %s26, 1
        %s290 = scalar_select %p289, %s26, 1
        %p291 = scmp.lt.s32.totalorder %s27, 0
        %s292 = scalar_select %p291, %s27, 0
        %s293 = sadd.s32 %s292, %s290
        %s294 = smul.addr %s293, 4
        %s295 = scalar_lea.vmem %s0, %s294
        %p296 = pneg %p57
        %p297 = pneg %p54
        %p298 = pneg %p78
        %p299 = pneg %p75
        %p300 = pneg %p99
        %p301 = pneg %p96
        %p302 = pneg %p120
        %p303 = pneg %p117
        %p304 = pneg %p141
        %p305 = pneg %p138
        %p306 = pneg %p162
        %p307 = pneg %p159
        %p308 = pneg %p183
        %p309 = pneg %p180
        %p310 = pneg %p204
        %p311 = pneg %p201
        %p312 = pneg %p232
        %p313 = pneg %p229
        %s314 = sand.u32 %s219, 1
        %s315 = scalar_lea.sflag [#allocation3], %s314
        %s316 = sand.u32 %s219, 1
        %s317 = smul.addr %s316, 8
        %s318 = scalar_lea.vmem [#allocation2], %s317
        %p319 = scmp.lt.s32.totalorder %s26, 1
        %s320 = scalar_select %p319, %s26, 1
        %p321 = scmp.lt.s32.totalorder %s27, 0
        %s322 = scalar_select %p321, %s27, 0
        %s323 = sadd.s32 %s322, %s320
        %s324 = smul.addr %s323, 4
        %s325 = scalar_lea.vmem %s0, %s324
        %v326 = vld [vmem:[%s325] sm:$0xf]
        %v327 = vld [vmem:[%s1] sm:$0xff]
        %v328 = vld [vmem:[%s1 + $0x8] sm:$0xff]
        %v329 = vld [vmem:[%s1 + $0x10] sm:$0xff]
        %v330 = vld [vmem:[%s1 + $0x18] sm:$0xff]
        %v331 = vld [vmem:[%s2] sm:$0xff]
        %v332 = vld [vmem:[%s2 + $0x8] sm:$0xff]
        %v333 = vld [vmem:[%s2 + $0x10] sm:$0xff]
        %v334 = vld [vmem:[%s2 + $0x18] sm:$0xff]
        %336 = vset.pattern.permute.xlu0 0
        %337 = vperm.xlu0 %336, %v331
        %v338 = vpop.permute.xlu0 %337
        %341 = vset.pattern.permute.xlu0 0
        %342 = vperm.xlu0 %341, %v332
        %v343 = vpop.permute.xlu0 %342
        %346 = vset.pattern.permute.xlu0 0
        %347 = vperm.xlu0 %346, %v333
        %v348 = vpop.permute.xlu0 %347
        %351 = vset.pattern.permute.xlu0 0
        %352 = vperm.xlu0 %351, %v334
        %v353 = vpop.permute.xlu0 %352
        %vm355 = vcmask 31744
        %v357 = vsel %vm355, %v327, 0
        %v360 = vsel %vm355, %v328, 0
        %v363 = vsel %vm355, %v329, 0
        %v366 = vsel %vm355, %v330, 0
        %vm368 = vcmask 1043456
        %v370 = vsel %vm368, %v326, 0
        %372 = vmatprep.subr.mxu0 0.0
        %373 = vmatpush1.msra.mxu0 %v370
        %374 = vmatprep.subr.mxu0 0.0
        %375 = vmatpush1.msra.mxu0 0.0
        %376 = vmatprep.subr.mxu0 0.0
        %377 = vmatpush1.msra.mxu0 0.0
        %378 = vmatprep.subr.mxu0 0.0
        %379 = vmatpush1.msra.mxu0 0.0
        %380 = vmatprep.subr.mxu0 0.0
        %381 = vmatpush1.msra.mxu0 0.0
        %382 = vmatprep.subr.mxu0 0.0
        %383 = vmatpush1.msra.mxu0 0.0
        %384 = vmatprep.subr.mxu0 0.0
        %385 = vmatpush1.msra.mxu0 0.0
        %386 = vmatprep.subr.mxu0 0.0
        %387 = vmatpush1.msra.mxu0 0.0
        %388 = vmatprep.subr.mxu0 0.0
        %389 = vmatpush1.msra.mxu0 0.0
        %390 = vmatprep.subr.mxu0 0.0
        %391 = vmatpush1.msra.mxu0 0.0
        %392 = vmatprep.subr.mxu0 0.0
        %393 = vmatpush1.msra.mxu0 0.0
        %394 = vmatprep.subr.mxu0 0.0
        %395 = vmatpush1.msra.mxu0 0.0
        %396 = vmatprep.subr.mxu0 0.0
        %397 = vmatpush1.msra.mxu0 0.0
        %398 = vmatprep.subr.mxu0 0.0
        %399 = vmatpush1.msra.mxu0 0.0
        %400 = vmatprep.subr.mxu0 0.0
        %401 = vmatpush1.msra.mxu0 0.0
        %402 = vmatprep.subr.mxu0 0.0
        %403 = vmatpush1.msra.mxu0 0.0
        %404 = vmatprep.subr.mxu0 0.0
        %405 = vmatpush1.msra.mxu0 0.0
        %406 = vmatprep.subr.mxu0 0.0
        %407 = vmatpush1.msra.mxu0 0.0
        %408 = vmatprep.subr.mxu0 0.0
        %409 = vmatpush1.msra.mxu0 0.0
        %410 = vmatprep.subr.mxu0 0.0
        %411 = vmatpush1.msra.mxu0 0.0
        %412 = vmatprep.subr.mxu0 0.0
        %413 = vmatpush1.msra.mxu0 0.0
        %414 = vmatprep.subr.mxu0 0.0
        %415 = vmatpush1.msra.mxu0 0.0
        %416 = vmatprep.subr.mxu0 0.0
        %417 = vmatpush1.msra.mxu0 0.0
        %418 = vmatprep.subr.mxu0 0.0
        %419 = vmatpush1.msra.mxu0 0.0
        %420 = vmatprep.subr.mxu0 0.0
        %421 = vmatpush1.msra.mxu0 0.0
        %422 = vmatprep.subr.mxu0 0.0
        %423 = vmatpush1.msra.mxu0 0.0
        %424 = vmatprep.subr.mxu0 0.0
        %425 = vmatpush1.msra.mxu0 0.0
        %426 = vmatprep.subr.mxu0 0.0
        %427 = vmatpush1.msra.mxu0 0.0
        %428 = vmatprep.subr.mxu0 0.0
        %429 = vmatpush1.msra.mxu0 0.0
        %430 = vmatprep.subr.mxu0 0.0
        %431 = vmatpush1.msra.mxu0 0.0
        %432 = vmatprep.subr.mxu0 0.0
        %433 = vmatpush1.msra.mxu0 0.0
        %434 = vmatprep.subr.mxu0 0.0
        %435 = vmatpush1.msra.mxu0 0.0
        %436 = vmatprep.mubr.f32.mxu0 0.0
        %437 = vmatmul.mubr.f32.gmra.mrb[0].mxu0 %v357
        %v438 = vpop.f32.mrb[0].mxu0
        %v439 = vadd.f32 %v338, %v438
        %v440 = vpop.f32.mrb[0].mxu0
        %441 = vmatprep.mubr.f32.mxu0 0.0
        %442 = vmatmul.mubr.f32.gmra.mrb[0].mxu0 %v360
        %v443 = vpop.f32.mrb[0].mxu0
        %v444 = vadd.f32 %v343, %v443
        %v445 = vpop.f32.mrb[0].mxu0
        %446 = vmatprep.mubr.f32.mxu0 0.0
        %447 = vmatmul.mubr.f32.gmra.mrb[0].mxu0 %v363
        %v448 = vpop.f32.mrb[0].mxu0
        %v449 = vadd.f32 %v348, %v448
        %v450 = vpop.f32.mrb[0].mxu0
        %451 = vmatprep.mubr.f32.mxu0 0.0
        %452 = vmatmul.mubr.f32.gmra.mrb[0].mxu0 %v366
        %v453 = vpop.f32.mrb[0].mxu0
        %v454 = vadd.f32 %v353, %v453
        %v455 = vpop.f32.mrb[0].mxu0
        %456 = vdwg.mxu0
        %v457 = vmax.f32 %v439, 0.0
        %v458 = vmax.f32 %v444, 0.0
        %v459 = vmax.f32 %v449, 0.0
        %v460 = vmax.f32 %v454, 0.0
        %v461 = vld [vmem:[%s3] sm:$0xff]
        %v462 = vld [vmem:[%s3 + $0x8] sm:$0xff]
        %v463 = vld [vmem:[%s4] sm:$0xff]
        %v464 = vld [vmem:[%s4 + $0x8] sm:$0xff]
        %466 = vset.pattern.permute.xlu0 0
        %467 = vperm.xlu0 %466, %v463
        %v468 = vpop.permute.xlu0 %467
        %471 = vset.pattern.permute.xlu0 0
        %472 = vperm.xlu0 %471, %v464
        %v473 = vpop.permute.xlu0 %472
        %vm475 = vcmask 261120
        %v477 = vsel %vm475, %v461, 0
        %v480 = vsel %vm475, %v462, 0
        %482 = vmatprep.subr.mxu0 0.0
        %483 = vmatpush1.msra.mxu0 %v457
        %484 = vmatprep.subr.mxu0 0.0
        %485 = vmatpush1.msra.mxu0 %v458
        %486 = vmatprep.subr.mxu0 0.0
        %487 = vmatpush1.msra.mxu0 %v459
        %488 = vmatprep.subr.mxu0 0.0
        %489 = vmatpush1.msra.mxu0 %v460
        %490 = vmatprep.subr.mxu0 0.0
        %491 = vmatpush1.msra.mxu0 0.0
        %492 = vmatprep.subr.mxu0 0.0
        %493 = vmatpush1.msra.mxu0 0.0
        %494 = vmatprep.subr.mxu0 0.0
        %495 = vmatpush1.msra.mxu0 0.0
        %496 = vmatprep.subr.mxu0 0.0
        %497 = vmatpush1.msra.mxu0 0.0
        %498 = vmatprep.subr.mxu0 0.0
        %499 = vmatpush1.msra.mxu0 0.0
        %500 = vmatprep.subr.mxu0 0.0
        %501 = vmatpush1.msra.mxu0 0.0
        %502 = vmatprep.subr.mxu0 0.0
        %503 = vmatpush1.msra.mxu0 0.0
        %504 = vmatprep.subr.mxu0 0.0
        %505 = vmatpush1.msra.mxu0 0.0
        %506 = vmatprep.subr.mxu0 0.0
        %507 = vmatpush1.msra.mxu0 0.0
        %508 = vmatprep.subr.mxu0 0.0
        %509 = vmatpush1.msra.mxu0 0.0
        %510 = vmatprep.subr.mxu0 0.0
        %511 = vmatpush1.msra.mxu0 0.0
        %512 = vmatprep.subr.mxu0 0.0
        %513 = vmatpush1.msra.mxu0 0.0
        %514 = vmatprep.subr.mxu0 0.0
        %515 = vmatpush1.msra.mxu0 0.0
        %516 = vmatprep.subr.mxu0 0.0
        %517 = vmatpush1.msra.mxu0 0.0
        %518 = vmatprep.subr.mxu0 0.0
        %519 = vmatpush1.msra.mxu0 0.0
        %520 = vmatprep.subr.mxu0 0.0
        %521 = vmatpush1.msra.mxu0 0.0
        %522 = vmatprep.subr.mxu0 0.0
        %523 = vmatpush1.msra.mxu0 0.0
        %524 = vmatprep.subr.mxu0 0.0
        %525 = vmatpush1.msra.mxu0 0.0
        %526 = vmatprep.subr.mxu0 0.0
        %527 = vmatpush1.msra.mxu0 0.0
        %528 = vmatprep.subr.mxu0 0.0
        %529 = vmatpush1.msra.mxu0 0.0
        %530 = vmatprep.subr.mxu0 0.0
        %531 = vmatpush1.msra.mxu0 0.0
        %532 = vmatprep.subr.mxu0 0.0
        %533 = vmatpush1.msra.mxu0 0.0
        %534 = vmatprep.subr.mxu0 0.0
        %535 = vmatpush1.msra.mxu0 0.0
        %536 = vmatprep.subr.mxu0 0.0
        %537 = vmatpush1.msra.mxu0 0.0
        %538 = vmatprep.subr.mxu0 0.0
        %539 = vmatpush1.msra.mxu0 0.0
        %540 = vmatprep.subr.mxu0 0.0
        %541 = vmatpush1.msra.mxu0 0.0
        %542 = vmatprep.subr.mxu0 0.0
        %543 = vmatpush1.msra.mxu0 0.0
        %544 = vmatprep.subr.mxu0 0.0
        %545 = vmatpush1.msra.mxu0 0.0
        %546 = vmatprep.mubr.f32.mxu0 0.0
        %547 = vmatmul.mubr.f32.gmra.mrb[0].mxu0 %v477
        %v548 = vpop.f32.mrb[0].mxu0
        %v549 = vadd.f32 %v468, %v548
        %v550 = vpop.f32.mrb[0].mxu0
        %551 = vmatprep.mubr.f32.mxu0 0.0
        %552 = vmatmul.mubr.f32.gmra.mrb[0].mxu0 %v480
        %v553 = vpop.f32.mrb[0].mxu0
        %v554 = vadd.f32 %v473, %v553
        %v555 = vpop.f32.mrb[0].mxu0
        %556 = vdwg.mxu0
        %v557 = vmax.f32 %v549, 0.0
        %v558 = vmax.f32 %v554, 0.0
        %v559 = vld [vmem:[%s5] sm:$0xff]
        %v560 = vld [vmem:[%s6] sm:$0xff]
        %v562 = vsel %vm355, %v560, 0
        %564 = vmatprep.subr.mxu0 0.0
        %565 = vmatpush1.msra.mxu0 %v370
        %566 = vmatprep.subr.mxu0 0.0
        %567 = vmatpush1.msra.mxu0 0.0
        %568 = vmatprep.subr.mxu0 0.0
        %569 = vmatpush1.msra.mxu0 0.0
        %570 = vmatprep.subr.mxu0 0.0
        %571 = vmatpush1.msra.mxu0 0.0
        %572 = vmatprep.subr.mxu0 0.0
        %573 = vmatpush1.msra.mxu0 0.0
        %574 = vmatprep.subr.mxu0 0.0
        %575 = vmatpush1.msra.mxu0 0.0
        %576 = vmatprep.subr.mxu0 0.0
        %577 = vmatpush1.msra.mxu0 0.0
        %578 = vmatprep.subr.mxu0 0.0
        %579 = vmatpush1.msra.mxu0 0.0
        %580 = vmatprep.subr.mxu0 0.0
        %581 = vmatpush1.msra.mxu0 0.0
        %582 = vmatprep.subr.mxu0 0.0
        %583 = vmatpush1.msra.mxu0 0.0
        %584 = vmatprep.subr.mxu0 0.0
        %585 = vmatpush1.msra.mxu0 0.0
        %586 = vmatprep.subr.mxu0 0.0
        %587 = vmatpush1.msra.mxu0 0.0
        %588 = vmatprep.subr.mxu0 0.0
        %589 = vmatpush1.msra.mxu0 0.0
        %590 = vmatprep.subr.mxu0 0.0
        %591 = vmatpush1.msra.mxu0 0.0
        %592 = vmatprep.subr.mxu0 0.0
        %593 = vmatpush1.msra.mxu0 0.0
        %594 = vmatprep.subr.mxu0 0.0
        %595 = vmatpush1.msra.mxu0 0.0
        %596 = vmatprep.subr.mxu0 0.0
        %597 = vmatpush1.msra.mxu0 0.0
        %598 = vmatprep.subr.mxu0 0.0
        %599 = vmatpush1.msra.mxu0 0.0
        %600 = vmatprep.subr.mxu0 0.0
        %601 = vmatpush1.msra.mxu0 0.0
        %602 = vmatprep.subr.mxu0 0.0
        %603 = vmatpush1.msra.mxu0 0.0
        %604 = vmatprep.subr.mxu0 0.0
        %605 = vmatpush1.msra.mxu0 0.0
        %606 = vmatprep.subr.mxu0 0.0
        %607 = vmatpush1.msra.mxu0 0.0
        %608 = vmatprep.subr.mxu0 0.0
        %609 = vmatpush1.msra.mxu0 0.0
        %610 = vmatprep.subr.mxu0 0.0
        %611 = vmatpush1.msra.mxu0 0.0
        %612 = vmatprep.subr.mxu0 0.0
        %613 = vmatpush1.msra.mxu0 0.0
        %614 = vmatprep.subr.mxu0 0.0
        %615 = vmatpush1.msra.mxu0 0.0
        %616 = vmatprep.subr.mxu0 0.0
        %617 = vmatpush1.msra.mxu0 0.0
        %618 = vmatprep.subr.mxu0 0.0
        %619 = vmatpush1.msra.mxu0 0.0
        %620 = vmatprep.subr.mxu0 0.0
        %621 = vmatpush1.msra.mxu0 0.0
        %622 = vmatprep.subr.mxu0 0.0
        %623 = vmatpush1.msra.mxu0 0.0
        %624 = vmatprep.subr.mxu0 0.0
        %625 = vmatpush1.msra.mxu0 0.0
        %626 = vmatprep.subr.mxu0 0.0
        %627 = vmatpush1.msra.mxu0 0.0
        %628 = vmatprep.mubr.f32.mxu0 0.0
        %629 = vmatmul.mubr.f32.gmra.mrb[0].mxu0 %v562
        %v630 = vpop.f32.mrb[0].mxu0
        %v631 = vadd.f32 0.0, %v630
        %v632 = vpop.f32.mrb[0].mxu0
        %633 = vdwg.mxu0
        %vm634 = vcmask 130048
        %v636 = vsel %vm634, %v559, 0
        %638 = vmatprep.subr.mxu0 0.0
        %639 = vmatpush1.msra.mxu0 %v557
        %640 = vmatprep.subr.mxu0 0.0
        %641 = vmatpush1.msra.mxu0 %v558
        %642 = vmatprep.subr.mxu0 0.0
        %643 = vmatpush1.msra.mxu0 0.0
        %644 = vmatprep.subr.mxu0 0.0
        %645 = vmatpush1.msra.mxu0 0.0
        %646 = vmatprep.subr.mxu0 0.0
        %647 = vmatpush1.msra.mxu0 0.0
        %648 = vmatprep.subr.mxu0 0.0
        %649 = vmatpush1.msra.mxu0 0.0
        %650 = vmatprep.subr.mxu0 0.0
        %651 = vmatpush1.msra.mxu0 0.0
        %652 = vmatprep.subr.mxu0 0.0
        %653 = vmatpush1.msra.mxu0 0.0
        %654 = vmatprep.subr.mxu0 0.0
        %655 = vmatpush1.msra.mxu0 0.0
        %656 = vmatprep.subr.mxu0 0.0
        %657 = vmatpush1.msra.mxu0 0.0
        %658 = vmatprep.subr.mxu0 0.0
        %659 = vmatpush1.msra.mxu0 0.0
        %660 = vmatprep.subr.mxu0 0.0
        %661 = vmatpush1.msra.mxu0 0.0
        %662 = vmatprep.subr.mxu0 0.0
        %663 = vmatpush1.msra.mxu0 0.0
        %664 = vmatprep.subr.mxu0 0.0
        %665 = vmatpush1.msra.mxu0 0.0
        %666 = vmatprep.subr.mxu0 0.0
        %667 = vmatpush1.msra.mxu0 0.0
        %668 = vmatprep.subr.mxu0 0.0
        %669 = vmatpush1.msra.mxu0 0.0
        %670 = vmatprep.subr.mxu0 0.0
        %671 = vmatpush1.msra.mxu0 0.0
        %672 = vmatprep.subr.mxu0 0.0
        %673 = vmatpush1.msra.mxu0 0.0
        %674 = vmatprep.subr.mxu0 0.0
        %675 = vmatpush1.msra.mxu0 0.0
        %676 = vmatprep.subr.mxu0 0.0
        %677 = vmatpush1.msra.mxu0 0.0
        %678 = vmatprep.subr.mxu0 0.0
        %679 = vmatpush1.msra.mxu0 0.0
        %680 = vmatprep.subr.mxu0 0.0
        %681 = vmatpush1.msra.mxu0 0.0
        %682 = vmatprep.subr.mxu0 0.0
        %683 = vmatpush1.msra.mxu0 0.0
        %684 = vmatprep.subr.mxu0 0.0
        %685 = vmatpush1.msra.mxu0 0.0
        %686 = vmatprep.subr.mxu0 0.0
        %687 = vmatpush1.msra.mxu0 0.0
        %688 = vmatprep.subr.mxu0 0.0
        %689 = vmatpush1.msra.mxu0 0.0
        %690 = vmatprep.subr.mxu0 0.0
        %691 = vmatpush1.msra.mxu0 0.0
        %692 = vmatprep.subr.mxu0 0.0
        %693 = vmatpush1.msra.mxu0 0.0
        %694 = vmatprep.subr.mxu0 0.0
        %695 = vmatpush1.msra.mxu0 0.0
        %696 = vmatprep.subr.mxu0 0.0
        %697 = vmatpush1.msra.mxu0 0.0
        %698 = vmatprep.subr.mxu0 0.0
        %699 = vmatpush1.msra.mxu0 0.0
        %700 = vmatprep.subr.mxu0 0.0
        %701 = vmatpush1.msra.mxu0 0.0
        %702 = vmatprep.mubr.f32.mxu0 0.0
        %703 = vmatmul.mubr.f32.gmra.mrb[0].mxu0 %v636
        %v704 = vpop.f32.mrb[0].mxu0
        %v705 = vadd.f32 %v631, %v704
        %v706 = vpop.f32.mrb[0].mxu0
        %707 = vdwg.mxu0
        %v708 = vld [vmem:[%s7] sm:$0xff]
        %710 = vset.pattern.permute.xlu0 0
        %711 = vperm.xlu0 %710, %v708
        %v712 = vpop.permute.xlu0 %711
        %v714 = vadd.f32 %v705, %v712
        %715 = vst [vmem:[%s318] sm:$0xff] %v714
        %s716 = sand.u32 %s219, 1
        %s717 = scalar_lea.sflag [#allocation3], %s716
        %s718 = sand.u32 %s219, 1
        %s719 = smul.addr %s718, 8
        %s720 = scalar_lea.vmem [#allocation2], %s719
        // Predicated region
        $region53: #{tpu_custom_call.1} parent=51 // pred_check
          %p721 = pneg %p229
        $region54: #{tpu_custom_call.1} parent=51 // pred_check_branch
          %723 = sbr.rel (%p721) target = $region56
        $region55: #{tpu_custom_call.1} parent=51 // pred_region
          %s725 = ssub.s32 128, 128
          %726 = vsyncadd %s717, %s725
          %s727 = sadd.s32 %s27, %s26
          %s728 = smul.addr %s727, 128
          %s729 = scalar_lea.hbm %s8, %s728
          %s731 = sshll.u32 %s720, 4
          %s732 = int_to_ptr.vmem [resolvable:$true] %s731
          %734 = dma.vmem_to_hbm [thread:$0]  %s732, 128, %s729, %s717
        $region56: #{tpu_custom_call.1} parent=51 // pred_fallthru
          _
      $region52: #{tpu_custom_call.1} parent=5 // pred_fallthru
        _
      %p735 = scmp.le.s32.totalorder 2, %s17
      // Predicated region
      $region57: #{tpu_custom_call.1} parent=5 // pred_check
        %p736 = pneg %p735
      $region58: #{tpu_custom_call.1} parent=5 // pred_check_branch
        %738 = sbr.rel (%p736) target = $region60
      $region59: #{tpu_custom_call.1} parent=5 // pred_region
        %s739 = ssub.s32 %s17, 2
        // Predicated region
        $region61: #{tpu_custom_call.1} parent=59 // pred_check
          %p740 = pneg %p235
        $region62: #{tpu_custom_call.1} parent=59 // pred_check_branch
          %742 = sbr.rel (%p740) target = $region64
        $region63: #{tpu_custom_call.1} parent=59 // pred_region
          %s743 = sand.u32 %s220, 1
          %s744 = scalar_lea.sflag [#allocation3], %s743
          %s745 = sand.u32 %s220, 1
          %s746 = smul.addr %s745, 8
          %s747 = scalar_lea.vmem [#allocation2], %s746
          %748 = dma.done %s744, 128
        $region64: #{tpu_custom_call.1} parent=59 // pred_fallthru
          _
      $region60: #{tpu_custom_call.1} parent=5 // pred_fallthru
        _
    $region6: #{tpu_custom_call.1} parent=1 // loop_footer
      %s21 = sadd.s32 1, %s17
    $region7: #{tpu_custom_call.1} parent=1 // loop_footer_branch
      %16 = sbr.rel target = $region3
    $region8: #{tpu_custom_call.1} parent=1 // loop_exit
      _
    %749 = vsyncpa [#allocation3], 1
    %s750 = scalar_lea.sflag [#allocation3], 1
    %751 = vsyncpa %s750, 1

</llo_original>
